<compile_context>
chip_gen: v7x
topology: tpu7x:2x2x1
jax: 0.10.0
libtpu: 0.0.40
codegen_flags: <defaults>
</compile_context>

<pallas_src>
import functools

import jax
import jax.numpy as jnp
from jax.experimental import pallas as pl
from jax.experimental.pallas import tpu as pltpu


def _round_up(x, m):
    return ((x + m - 1) // m) * m


def _cdiv(a, b):
    return -(-a // b)


def _mlp_kernel(x_ref, w1_ref, w2_ref, w3_ref, y_ref, *, matmul_dtype, n_out):
    """Fused 3-layer MLP on one batch tile, transposed orientation.

    x_ref : (k_in, bn)   augmented input, row k_in-1 == 1 (carries layer-1 bias)
    w1_ref: (128, k_in)  W1^T | b1, plus a constant-1 hidden unit in row 127
    w2_ref: (128, 128)   W2^T | b2, constant unit propagated in row/col 127
    w3_ref: (8,   128)   W3^T | b3 in row 0, rows 1..7 zero
    y_ref : (n_out, bn)  lane-dense output row(s) -> 4 B/batch-element HBM write

    All three layers run on the MXU with f32 accumulation; ReLU on the VPU in
    f32 (v5e has no bf16 VPU).  No bias broadcasts, no XLU ops.
    """
    x = x_ref[...]                                                   # (k_in, bn)

    h1 = jnp.dot(w1_ref[...], x, preferred_element_type=jnp.float32)  # (128, bn)
    h1 = jnp.maximum(h1, 0.0)

    h2 = jnp.dot(w2_ref[...], h1.astype(matmul_dtype),
                 preferred_element_type=jnp.float32)                  # (128, bn)
    h2 = jnp.maximum(h2, 0.0)

    y = jnp.dot(w3_ref[...], h2.astype(matmul_dtype),
                preferred_element_type=jnp.float32)                   # (8, bn)
    y_ref[...] = y[0:n_out, :].astype(y_ref.dtype)


def _pack_layer(w, b, k_pad, m_pad, *, add_const_row):
    """Pack a Linear layer for the transposed formulation.

    w: (k_real, m_real) stored [in, out];  b: (1, m_real).
    Returns an (m_pad, k_pad) f32 matrix M such that, with the previous
    activation carrying a constant 1 in its LAST row (index k_pad-1),
      act_out = act(M @ act_in)  ==  act(act_in_real @ w + b)   (rows 0..m_real-1)
    and (if add_const_row) row m_pad-1 of the output is exactly 1 after ReLU,
    so the next layer's bias can ride in its last column.
    """
    k_real, m_real = w.shape
    if add_const_row:
        assert m_pad >= m_real + 1, "need a spare padded row for the const unit"
    mat = jnp.zeros((m_pad, k_pad), jnp.float32)
    mat = mat.at[:m_real, :k_real].set(w.T)
    mat = mat.at[:m_real, k_pad - 1].set(b.reshape(-1))
    if add_const_row:
        mat = mat.at[m_pad - 1, k_pad - 1].set(1.0)
    return mat


@functools.partial(jax.jit, static_argnames=("block_n", "matmul_dtype"))
def nnet_forward(x, w1, b1, w2, b2, w3, b3, *, block_n=None,
                 matmul_dtype=jnp.bfloat16):
    """Pallas forward pass. x: [N, n_inputs] f32. Returns [N, n_outputs] f32.

    Weights are stored [in_features, out_features] (i.e. torch W pre-transposed),
    biases [1, out_features]; semantics match torch.nn.Linear + ReLU stacking.
    """
    n, n_in = x.shape
    nh1 = w1.shape[1]
    nh2 = w2.shape[1]
    n_out = w3.shape[1]

    # ---- Padded sizes --------------------------------------------------------
    k_in = _round_up(n_in + 1, 8)        # +1 constant feature carrying b1
    nh1p = _round_up(nh1 + 1, 128)       # +1 constant hidden unit carrying b2
    nh2p = _round_up(nh2 + 1, 128)       # +1 constant hidden unit carrying b3
    m_out = _round_up(n_out, 8)          # MXU LHS rows for layer 3

    # ---- Batch tiling (batch lives on the LANE axis) -------------------------
    # Bounded padding waste (<= ~256 rows/tile), >=2 tiles for N >= 512 so both
    # v7x TensorCores get work, cap 4096 rows/tile for VMEM headroom.
    if block_n is None:
        tiles = max(1, _cdiv(n, 4096))
        if n >= 512:
            tiles = max(tiles, 2)
        block_n = _round_up(_cdiv(n, tiles), 256)
    bn = max(128, min(_round_up(block_n, 128), 4096))
    n_pad = _round_up(n, bn)
    grid = (n_pad // bn,)

    # ---- Build transposed, augmented input (k_in, n_pad) ---------------------
    in_dtype = (jnp.float32 if jnp.dtype(matmul_dtype) == jnp.dtype(jnp.float32)
                else matmul_dtype)
    xT = jnp.concatenate(
        [x.T,
         jnp.zeros((k_in - n_in - 1, n), x.dtype),
         jnp.ones((1, n), x.dtype)],               # constant-1 feature (last row)
        axis=0)
    xT = jnp.pad(xT, ((0, 0), (0, n_pad - n))).astype(in_dtype)

    # ---- Pack weights (biases folded in), pre-cast to matmul dtype -----------
    w1p = _pack_layer(w1, b1, k_in, nh1p, add_const_row=True).astype(matmul_dtype)
    w2p = _pack_layer(w2, b2, nh1p, nh2p, add_const_row=True).astype(matmul_dtype)
    w3p = _pack_layer(w3, b3, nh2p, m_out, add_const_row=False).astype(matmul_dtype)

    full = lambda i: (0, 0)   # weights resident in VMEM for every tile

    in_bytes = jnp.dtype(in_dtype).itemsize
    w_bytes = jnp.dtype(matmul_dtype).itemsize
    flops = 2 * n_pad * (k_in * nh1p + nh1p * nh2p + nh2p * m_out)
    bytes_accessed = (k_in * n_pad * in_bytes
                      + (w1p.size + w2p.size + w3p.size) * w_bytes
                      + n_pad * n_out * 4)

    y_t = pl.pallas_call(
        functools.partial(_mlp_kernel, matmul_dtype=matmul_dtype, n_out=n_out),
        out_shape=jax.ShapeDtypeStruct((n_out, n_pad), jnp.float32),
        grid_spec=pltpu.PrefetchScalarGridSpec(
            num_scalar_prefetch=0,
            grid=grid,
            in_specs=[
                pl.BlockSpec((k_in, bn), lambda i: (0, i)),    # X^T tile
                pl.BlockSpec((nh1p, k_in), full),              # packed layer 1
                pl.BlockSpec((nh2p, nh1p), full),              # packed layer 2
                pl.BlockSpec((m_out, nh2p), full),             # packed layer 3
            ],
            out_specs=pl.BlockSpec((n_out, bn), lambda i: (0, i)),
        ),
        compiler_params=pltpu.CompilerParams(
            dimension_semantics=("parallel",),
            vmem_limit_bytes=32 * 1024 * 1024),
        cost_estimate=pl.CostEstimate(
            flops=flops, transcendentals=0, bytes_accessed=bytes_accessed),
    )(xT, w1p, w2p, w3p)

    # Cheap wrapper-side reshape of the tiny (n_out, N) slab back to (N, n_out).
    return y_t[:, :n].T


def _init_linear(key, n_in, n_out):
    """Deterministic init matching torch.nn.Linear's default U(-1/sqrt(in), 1/sqrt(in)).
    Weight is stored as [n_in, n_out] (transposed vs torch) for x @ W."""
    kw, kb = jax.random.split(key)
    bound = 1.0 / jnp.sqrt(jnp.float32(n_in))
    w = jax.random.uniform(kw, (n_in, n_out), jnp.float32, -bound, bound)
    b = jax.random.uniform(kb, (1, n_out), jnp.float32, -bound, bound)
    return w, b


if __name__ == "__main__":
    # Module config from the script: n_inputs=5 features, n_hiddens=[100,100],
    # n_outputs=1, act_func='relu'.  Small batch of airfoil-like rows.
    n_inputs, n_hiddens, n_outputs = 5, [100, 100], 1
    batch = 16

    key = jax.random.PRNGKey(0)
    k_x, k1, k2, k3 = jax.random.split(key, 4)

    # Deterministic synthetic inputs (stand-in for standardized airfoil features).
    x = jax.random.normal(k_x, (batch, n_inputs), jnp.float32)
    w1, b1 = _init_linear(k1, n_inputs, n_hiddens[0])
    w2, b2 = _init_linear(k2, n_hiddens[0], n_hiddens[1])
    w3, b3 = _init_linear(k3, n_hiddens[1], n_outputs)

    # Pure-JAX f32 reference of the same forward pass.
    h1 = jnp.maximum(x @ w1 + b1, 0.0)
    h2 = jnp.maximum(h1 @ w2 + b2, 0.0)
    y_ref = h2 @ w3 + b3

    # 1) Exact-f32 kernel path (matmul_dtype=f32) must match the reference tightly.
    y_f32 = jax.block_until_ready(
        nnet_forward(x, w1, b1, w2, b2, w3, b3, matmul_dtype=jnp.float32))
    assert y_f32.shape == (batch, n_outputs)
    assert jnp.allclose(y_f32, y_ref, atol=1e-4, rtol=1e-4)

    # 2) Default fast path (bf16 inputs/weights, f32 accumulation) stays close.
    y_fast = jax.block_until_ready(nnet_forward(x, w1, b1, w2, b2, w3, b3))
    assert y_fast.shape == (batch, n_outputs)
    assert jnp.allclose(y_fast, y_ref, atol=2e-2, rtol=2e-2)

    # TODO(synk): train()/use() input-output standardization (Xmeans/Xstds etc.)
    # and the Adam training loop are data-statistics/optimizer glue, not part of
    # forward(); left out of the kernel.
    print("KERNEL_OK")
</pallas_src>

<mosaic_0001>
module attributes {stable_mosaic.version = 11 : i64} {
  func.func @_mlp_kernel(%arg0: i32, %arg1: memref<8x256xf32, #tpu.memory_space<vmem>>, %arg2: memref<128x8xf32, #tpu.memory_space<vmem>>, %arg3: memref<128x128xf32, #tpu.memory_space<vmem>>, %arg4: memref<8x128xf32, #tpu.memory_space<vmem>>, %arg5: memref<1x256xf32, #tpu.memory_space<vmem>>) attributes {dimension_semantics = [#tpu.dimension_semantics<parallel>], iteration_bounds = array<i64: 1>, scalar_prefetch = 0 : i64, scratch_operands = 0 : i64, tpu.core_type = #tpu.core_type<tc>, window_params = [{transform_indices = @transform_0, window_bounds = array<i64: 8, 256>}, {pipeline_mode = #tpu.pipeline_mode<synchronous>, transform_indices = @transform_1, window_bounds = array<i64: 128, 8>}, {pipeline_mode = #tpu.pipeline_mode<synchronous>, transform_indices = @transform_2, window_bounds = array<i64: 128, 128>}, {pipeline_mode = #tpu.pipeline_mode<synchronous>, transform_indices = @transform_3, window_bounds = array<i64: 8, 128>}, {transform_indices = @transform_4, window_bounds = array<i64: 1, 256>}]} {
    %c0 = arith.constant 0 : index
    %c0_0 = arith.constant 0 : index
    %0 = vector.load %arg1[%c0, %c0_0] : memref<8x256xf32, #tpu.memory_space<vmem>>, vector<8x256xf32>
    %c0_1 = arith.constant 0 : index
    %c0_2 = arith.constant 0 : index
    %1 = vector.load %arg2[%c0_1, %c0_2] : memref<128x8xf32, #tpu.memory_space<vmem>>, vector<128x8xf32>
    %cst = arith.constant dense<0.000000e+00> : vector<128x256xf32>
    %2 = tpu.matmul %1, %0, %cst {dimension_numbers = #tpu.dot_dimension_numbers<[1], [0], [0], [1], [0, 0, 1, 1], [], []>} : vector<128x8xf32>, vector<8x256xf32>, vector<128x256xf32> -> vector<128x256xf32>
    %cst_3 = arith.constant 0.000000e+00 : f32
    %3 = vector.broadcast %cst_3 : f32 to vector<128x256xf32>
    %4 = arith.maximumf %2, %3 : vector<128x256xf32>
    %c0_4 = arith.constant 0 : index
    %c0_5 = arith.constant 0 : index
    %5 = vector.load %arg3[%c0_4, %c0_5] : memref<128x128xf32, #tpu.memory_space<vmem>>, vector<128x128xf32>
    %cst_6 = arith.constant dense<0.000000e+00> : vector<128x256xf32>
    %6 = tpu.matmul %5, %4, %cst_6 {dimension_numbers = #tpu.dot_dimension_numbers<[1], [0], [0], [1], [0, 0, 1, 1], [], []>} : vector<128x128xf32>, vector<128x256xf32>, vector<128x256xf32> -> vector<128x256xf32>
    %cst_7 = arith.constant 0.000000e+00 : f32
    %7 = vector.broadcast %cst_7 : f32 to vector<128x256xf32>
    %8 = arith.maximumf %6, %7 : vector<128x256xf32>
    %c0_8 = arith.constant 0 : index
    %c0_9 = arith.constant 0 : index
    %9 = vector.load %arg4[%c0_8, %c0_9] : memref<8x128xf32, #tpu.memory_space<vmem>>, vector<8x128xf32>
    %cst_10 = arith.constant dense<0.000000e+00> : vector<8x256xf32>
    %10 = tpu.matmul %9, %8, %cst_10 {dimension_numbers = #tpu.dot_dimension_numbers<[1], [0], [0], [1], [0, 0, 1, 1], [], []>} : vector<8x128xf32>, vector<128x256xf32>, vector<8x256xf32> -> vector<8x256xf32>
    %11 = vector.extract_strided_slice %10 {offsets = [0, 0], sizes = [1, 256], strides = [1, 1]} : vector<8x256xf32> to vector<1x256xf32>
    %c0_11 = arith.constant 0 : index
    %c0_12 = arith.constant 0 : index
    %12 = vector.load %arg5[%c0_11, %c0_12] : memref<1x256xf32, #tpu.memory_space<vmem>>, vector<1x256xf32>
    tpu.vector_store %arg5[%c0_11, %c0_12], %11 {strides = array<i32>} : memref<1x256xf32, #tpu.memory_space<vmem>>, vector<1x256xf32>,
    return
  }
  func.func @transform_0(%arg0: i32) -> (i32, i32) {
    %c0_i32 = arith.constant 0 : i32
    %c0_i32_0 = arith.constant 0 : i32
    return %c0_i32, %arg0 : i32, i32
  }
  func.func @transform_1(%arg0: i32) -> (i32, i32) {
    %c0_i32 = arith.constant 0 : i32
    %c0_i32_0 = arith.constant 0 : i32
    %c0_i32_1 = arith.constant 0 : i32
    return %c0_i32, %c0_i32_0 : i32, i32
  }
  func.func @transform_2(%arg0: i32) -> (i32, i32) {
    %c0_i32 = arith.constant 0 : i32
    %c0_i32_0 = arith.constant 0 : i32
    %c0_i32_1 = arith.constant 0 : i32
    return %c0_i32, %c0_i32_0 : i32, i32
  }
  func.func @transform_3(%arg0: i32) -> (i32, i32) {
    %c0_i32 = arith.constant 0 : i32
    %c0_i32_0 = arith.constant 0 : i32
    %c0_i32_1 = arith.constant 0 : i32
    return %c0_i32, %c0_i32_0 : i32, i32
  }
  func.func @transform_4(%arg0: i32) -> (i32, i32) {
    %c0_i32 = arith.constant 0 : i32
    %c0_i32_0 = arith.constant 0 : i32
    return %c0_i32, %arg0 : i32, i32
  }
}

</mosaic_0001>

<llo_original>
// kernel: nnet_forward.1
$region0: #{nnet_forward.1}
  #allocation0 [shape = 'u32[]', space=smem, size = 0x4, offset = 0x4, fixed_abs, tag = 'smem constant byte address 0x4 - core index']
  #allocation1 [shape = 'u32[144,128]{1,0:T(1,128)}', space=vmem, size = 0x12000, scoped, tag = 'internal scratch']
  %s0 = inlined_call_operand.vmem [shape: f32[8,256], index: 0, kind: input, shape index: {}]
  %s1 = inlined_call_operand.vmem [shape: f32[128,8], index: 1, kind: input, shape index: {}]
  %s2 = inlined_call_operand.vmem [shape: f32[128,128], index: 2, kind: input, shape index: {}]
  %s3 = inlined_call_operand.vmem [shape: f32[8,128], index: 3, kind: input, shape index: {}]
  %s4 = inlined_call_operand.vmem [shape: f32[1,256], index: 4, kind: output, shape index: {}]
  %s5 = sld [smem:[#allocation0]]
  $region26: #{nnet_forward.1} parent=0
    _
  %s7 = ssub.s32 1, %s5
  %s8 = scalar_select 0, %s7, %s5
  // Predicated region
  $region2: #{nnet_forward.1} parent=0 // pred_check
    _
  $region3: #{nnet_forward.1} parent=0 // pred_check_branch
    %10 = sbr.rel (0) target = $region5
  $region4: #{nnet_forward.1} parent=0 // pred_region
    _
  $region5: #{nnet_forward.1} parent=0 // pred_fallthru
    _
  // Predicated region
  $region6: #{nnet_forward.1} parent=0 // pred_check
    _
  $region7: #{nnet_forward.1} parent=0 // pred_check_branch
    %12 = sbr.rel (0) target = $region9
  $region8: #{nnet_forward.1} parent=0 // pred_region
    _
  $region9: #{nnet_forward.1} parent=0 // pred_fallthru
    _
  // Predicated region
  $region10: #{nnet_forward.1} parent=0 // pred_check
    _
  $region11: #{nnet_forward.1} parent=0 // pred_check_branch
    %14 = sbr.rel (0) target = $region13
  $region12: #{nnet_forward.1} parent=0 // pred_region
    _
  $region13: #{nnet_forward.1} parent=0 // pred_fallthru
    _
  // Predicated region
  $region14: #{nnet_forward.1} parent=0 // pred_check
    _
  $region15: #{nnet_forward.1} parent=0 // pred_check_branch
    %16 = sbr.rel (0) target = $region17
  $region16: #{nnet_forward.1} parent=0 // pred_region
    _
  $region17: #{nnet_forward.1} parent=0 // pred_fallthru
    _
  %v17 = vld [vmem:[%s0] sm:$0xff]
  %v18 = vld [vmem:[%s0 + $0x8] sm:$0xff]
  %v19 = vld [vmem:[%s1] sm:$0xff]
  %v20 = vld [vmem:[%s1 + $0x8] sm:$0xff]
  %v21 = vld [vmem:[%s1 + $0x10] sm:$0xff]
  %v22 = vld [vmem:[%s1 + $0x18] sm:$0xff]
  %v23 = vld [vmem:[%s1 + $0x20] sm:$0xff]
  %v24 = vld [vmem:[%s1 + $0x28] sm:$0xff]
  %v25 = vld [vmem:[%s1 + $0x30] sm:$0xff]
  %v26 = vld [vmem:[%s1 + $0x38] sm:$0xff]
  %v27 = vld [vmem:[%s1 + $0x40] sm:$0xff]
  %v28 = vld [vmem:[%s1 + $0x48] sm:$0xff]
  %v29 = vld [vmem:[%s1 + $0x50] sm:$0xff]
  %v30 = vld [vmem:[%s1 + $0x58] sm:$0xff]
  %v31 = vld [vmem:[%s1 + $0x60] sm:$0xff]
  %v32 = vld [vmem:[%s1 + $0x68] sm:$0xff]
  %v33 = vld [vmem:[%s1 + $0x70] sm:$0xff]
  %v34 = vld [vmem:[%s1 + $0x78] sm:$0xff]
  %vm35 = vcmask 64512
  %v37 = vsel %vm35, %v19, 0
  %v40 = vsel %vm35, %v20, 0
  %v43 = vsel %vm35, %v21, 0
  %v46 = vsel %vm35, %v22, 0
  %v49 = vsel %vm35, %v23, 0
  %v52 = vsel %vm35, %v24, 0
  %v55 = vsel %vm35, %v25, 0
  %v58 = vsel %vm35, %v26, 0
  %v61 = vsel %vm35, %v27, 0
  %v64 = vsel %vm35, %v28, 0
  %v67 = vsel %vm35, %v29, 0
  %v70 = vsel %vm35, %v30, 0
  %v73 = vsel %vm35, %v31, 0
  %v76 = vsel %vm35, %v32, 0
  %v79 = vsel %vm35, %v33, 0
  %v82 = vsel %vm35, %v34, 0
  %84 = vmatprep.subr.mxu0 %v18
  %85 = vmatpush1.msra.mxu0 %v17
  %86 = vmatprep.subr.mxu0 0.0
  %87 = vmatpush1.msra.mxu0 0.0
  %88 = vmatprep.subr.mxu0 0.0
  %89 = vmatpush1.msra.mxu0 0.0
  %90 = vmatprep.subr.mxu0 0.0
  %91 = vmatpush1.msra.mxu0 0.0
  %92 = vmatprep.subr.mxu0 0.0
  %93 = vmatpush1.msra.mxu0 0.0
  %94 = vmatprep.subr.mxu0 0.0
  %95 = vmatpush1.msra.mxu0 0.0
  %96 = vmatprep.subr.mxu0 0.0
  %97 = vmatpush1.msra.mxu0 0.0
  %98 = vmatprep.subr.mxu0 0.0
  %99 = vmatpush1.msra.mxu0 0.0
  %100 = vmatprep.subr.mxu0 0.0
  %101 = vmatpush1.msra.mxu0 0.0
  %102 = vmatprep.subr.mxu0 0.0
  %103 = vmatpush1.msra.mxu0 0.0
  %104 = vmatprep.subr.mxu0 0.0
  %105 = vmatpush1.msra.mxu0 0.0
  %106 = vmatprep.subr.mxu0 0.0
  %107 = vmatpush1.msra.mxu0 0.0
  %108 = vmatprep.subr.mxu0 0.0
  %109 = vmatpush1.msra.mxu0 0.0
  %110 = vmatprep.subr.mxu0 0.0
  %111 = vmatpush1.msra.mxu0 0.0
  %112 = vmatprep.subr.mxu0 0.0
  %113 = vmatpush1.msra.mxu0 0.0
  %114 = vmatprep.subr.mxu0 0.0
  %115 = vmatpush1.msra.mxu0 0.0
  %116 = vmatprep.subr.mxu0 0.0
  %117 = vmatpush1.msra.mxu0 0.0
  %118 = vmatprep.subr.mxu0 0.0
  %119 = vmatpush1.msra.mxu0 0.0
  %120 = vmatprep.subr.mxu0 0.0
  %121 = vmatpush1.msra.mxu0 0.0
  %122 = vmatprep.subr.mxu0 0.0
  %123 = vmatpush1.msra.mxu0 0.0
  %124 = vmatprep.subr.mxu0 0.0
  %125 = vmatpush1.msra.mxu0 0.0
  %126 = vmatprep.subr.mxu0 0.0
  %127 = vmatpush1.msra.mxu0 0.0
  %128 = vmatprep.subr.mxu0 0.0
  %129 = vmatpush1.msra.mxu0 0.0
  %130 = vmatprep.subr.mxu0 0.0
  %131 = vmatpush1.msra.mxu0 0.0
  %132 = vmatprep.subr.mxu0 0.0
  %133 = vmatpush1.msra.mxu0 0.0
  %134 = vmatprep.subr.mxu0 0.0
  %135 = vmatpush1.msra.mxu0 0.0
  %136 = vmatprep.subr.mxu0 0.0
  %137 = vmatpush1.msra.mxu0 0.0
  %138 = vmatprep.subr.mxu0 0.0
  %139 = vmatpush1.msra.mxu0 0.0
  %140 = vmatprep.subr.mxu0 0.0
  %141 = vmatpush1.msra.mxu0 0.0
  %142 = vmatprep.subr.mxu0 0.0
  %143 = vmatpush1.msra.mxu0 0.0
  %144 = vmatprep.subr.mxu0 0.0
  %145 = vmatpush1.msra.mxu0 0.0
  %146 = vmatprep.subr.mxu0 0.0
  %147 = vmatpush1.msra.mxu0 0.0
  %148 = vmatprep.mubr.f32.mxu0 0.0
  %149 = vmatmul.mubr.f32.gmra.mrb[0].mxu0 %v37
  %v150 = vpop.f32.mrb[0].mxu0
  %v151 = vadd.f32 0.0, %v150
  %v152 = vpop.f32.mrb[0].mxu0
  %v153 = vadd.f32 0.0, %v152
  %154 = vmatprep.mubr.f32.mxu0 0.0
  %155 = vmatmul.mubr.f32.gmra.mrb[0].mxu0 %v40
  %v156 = vpop.f32.mrb[0].mxu0
  %v157 = vadd.f32 0.0, %v156
  %v158 = vpop.f32.mrb[0].mxu0
  %v159 = vadd.f32 0.0, %v158
  %160 = vmatprep.mubr.f32.mxu0 0.0
  %161 = vmatmul.mubr.f32.gmra.mrb[0].mxu0 %v43
  %v162 = vpop.f32.mrb[0].mxu0
  %v163 = vadd.f32 0.0, %v162
  %v164 = vpop.f32.mrb[0].mxu0
  %v165 = vadd.f32 0.0, %v164
  %166 = vmatprep.mubr.f32.mxu0 0.0
  %167 = vmatmul.mubr.f32.gmra.mrb[0].mxu0 %v46
  %v168 = vpop.f32.mrb[0].mxu0
  %v169 = vadd.f32 0.0, %v168
  %v170 = vpop.f32.mrb[0].mxu0
  %v171 = vadd.f32 0.0, %v170
  %172 = vmatprep.mubr.f32.mxu0 0.0
  %173 = vmatmul.mubr.f32.gmra.mrb[0].mxu0 %v49
  %v174 = vpop.f32.mrb[0].mxu0
  %v175 = vadd.f32 0.0, %v174
  %v176 = vpop.f32.mrb[0].mxu0
  %v177 = vadd.f32 0.0, %v176
  %178 = vmatprep.mubr.f32.mxu0 0.0
  %179 = vmatmul.mubr.f32.gmra.mrb[0].mxu0 %v52
  %v180 = vpop.f32.mrb[0].mxu0
  %v181 = vadd.f32 0.0, %v180
  %v182 = vpop.f32.mrb[0].mxu0
  %v183 = vadd.f32 0.0, %v182
  %184 = vmatprep.mubr.f32.mxu0 0.0
  %185 = vmatmul.mubr.f32.gmra.mrb[0].mxu0 %v55
  %v186 = vpop.f32.mrb[0].mxu0
  %v187 = vadd.f32 0.0, %v186
  %v188 = vpop.f32.mrb[0].mxu0
  %v189 = vadd.f32 0.0, %v188
  %190 = vmatprep.mubr.f32.mxu0 0.0
  %191 = vmatmul.mubr.f32.gmra.mrb[0].mxu0 %v58
  %v192 = vpop.f32.mrb[0].mxu0
  %v193 = vadd.f32 0.0, %v192
  %v194 = vpop.f32.mrb[0].mxu0
  %v195 = vadd.f32 0.0, %v194
  %196 = vmatprep.mubr.f32.mxu0 0.0
  %197 = vmatmul.mubr.f32.gmra.mrb[0].mxu0 %v61
  %v198 = vpop.f32.mrb[0].mxu0
  %v199 = vadd.f32 0.0, %v198
  %v200 = vpop.f32.mrb[0].mxu0
  %v201 = vadd.f32 0.0, %v200
  %202 = vmatprep.mubr.f32.mxu0 0.0
  %203 = vmatmul.mubr.f32.gmra.mrb[0].mxu0 %v64
  %v204 = vpop.f32.mrb[0].mxu0
  %v205 = vadd.f32 0.0, %v204
  %v206 = vpop.f32.mrb[0].mxu0
  %v207 = vadd.f32 0.0, %v206
  %208 = vmatprep.mubr.f32.mxu0 0.0
  %209 = vmatmul.mubr.f32.gmra.mrb[0].mxu0 %v67
  %v210 = vpop.f32.mrb[0].mxu0
  %v211 = vadd.f32 0.0, %v210
  %v212 = vpop.f32.mrb[0].mxu0
  %v213 = vadd.f32 0.0, %v212
  %214 = vmatprep.mubr.f32.mxu0 0.0
  %215 = vmatmul.mubr.f32.gmra.mrb[0].mxu0 %v70
  %v216 = vpop.f32.mrb[0].mxu0
  %v217 = vadd.f32 0.0, %v216
  %v218 = vpop.f32.mrb[0].mxu0
  %v219 = vadd.f32 0.0, %v218
  %220 = vmatprep.mubr.f32.mxu0 0.0
  %221 = vmatmul.mubr.f32.gmra.mrb[0].mxu0 %v73
  %v222 = vpop.f32.mrb[0].mxu0
  %v223 = vadd.f32 0.0, %v222
  %v224 = vpop.f32.mrb[0].mxu0
  %v225 = vadd.f32 0.0, %v224
  %226 = vmatprep.mubr.f32.mxu0 0.0
  %227 = vmatmul.mubr.f32.gmra.mrb[0].mxu0 %v76
  %v228 = vpop.f32.mrb[0].mxu0
  %v229 = vadd.f32 0.0, %v228
  %v230 = vpop.f32.mrb[0].mxu0
  %v231 = vadd.f32 0.0, %v230
  %232 = vmatprep.mubr.f32.mxu0 0.0
  %233 = vmatmul.mubr.f32.gmra.mrb[0].mxu0 %v79
  %v234 = vpop.f32.mrb[0].mxu0
  %v235 = vadd.f32 0.0, %v234
  %v236 = vpop.f32.mrb[0].mxu0
  %v237 = vadd.f32 0.0, %v236
  %238 = vmatprep.mubr.f32.mxu0 0.0
  %239 = vmatmul.mubr.f32.gmra.mrb[0].mxu0 %v82
  %v240 = vpop.f32.mrb[0].mxu0
  %v241 = vadd.f32 0.0, %v240
  %v242 = vpop.f32.mrb[0].mxu0
  %v243 = vadd.f32 0.0, %v242
  %244 = vdwg.mxu0
  %v245 = vmax.f32 %v151, 0.0
  %v246 = vmax.f32 %v153, 0.0
  %v247 = vmax.f32 %v157, 0.0
  %v248 = vmax.f32 %v159, 0.0
  %v249 = vmax.f32 %v163, 0.0
  %v250 = vmax.f32 %v165, 0.0
  %v251 = vmax.f32 %v169, 0.0
  %v252 = vmax.f32 %v171, 0.0
  %v253 = vmax.f32 %v175, 0.0
  %v254 = vmax.f32 %v177, 0.0
  %v255 = vmax.f32 %v181, 0.0
  %v256 = vmax.f32 %v183, 0.0
  %v257 = vmax.f32 %v187, 0.0
  %v258 = vmax.f32 %v189, 0.0
  %v259 = vmax.f32 %v193, 0.0
  %v260 = vmax.f32 %v195, 0.0
  %v261 = vmax.f32 %v199, 0.0
  %v262 = vmax.f32 %v201, 0.0
  %v263 = vmax.f32 %v205, 0.0
  %v264 = vmax.f32 %v207, 0.0
  %v265 = vmax.f32 %v211, 0.0
  %v266 = vmax.f32 %v213, 0.0
  %v267 = vmax.f32 %v217, 0.0
  %v268 = vmax.f32 %v219, 0.0
  %v269 = vmax.f32 %v223, 0.0
  %v270 = vmax.f32 %v225, 0.0
  %v271 = vmax.f32 %v229, 0.0
  %v272 = vmax.f32 %v231, 0.0
  %v273 = vmax.f32 %v235, 0.0
  %v274 = vmax.f32 %v237, 0.0
  %v275 = vmax.f32 %v241, 0.0
  %v276 = vmax.f32 %v243, 0.0
  %v277 = vld [vmem:[%s2] sm:$0xff]
  %v278 = vld [vmem:[%s2 + $0x8] sm:$0xff]
  %v279 = vld [vmem:[%s2 + $0x10] sm:$0xff]
  %v280 = vld [vmem:[%s2 + $0x18] sm:$0xff]
  %v281 = vld [vmem:[%s2 + $0x20] sm:$0xff]
  %v282 = vld [vmem:[%s2 + $0x28] sm:$0xff]
  %v283 = vld [vmem:[%s2 + $0x30] sm:$0xff]
  %v284 = vld [vmem:[%s2 + $0x38] sm:$0xff]
  %v285 = vld [vmem:[%s2 + $0x40] sm:$0xff]
  %v286 = vld [vmem:[%s2 + $0x48] sm:$0xff]
  %v287 = vld [vmem:[%s2 + $0x50] sm:$0xff]
  %v288 = vld [vmem:[%s2 + $0x58] sm:$0xff]
  %v289 = vld [vmem:[%s2 + $0x60] sm:$0xff]
  %v290 = vld [vmem:[%s2 + $0x68] sm:$0xff]
  %v291 = vld [vmem:[%s2 + $0x70] sm:$0xff]
  %v292 = vld [vmem:[%s2 + $0x78] sm:$0xff]
  %293 = vmatprep.subr.mxu0 %v246
  %294 = vmatpush1.msra.mxu0 %v245
  %295 = vmatprep.subr.mxu0 %v248
  %296 = vmatpush1.msra.mxu0 %v247
  %297 = vmatprep.subr.mxu0 %v250
  %298 = vmatpush1.msra.mxu0 %v249
  %299 = vmatprep.subr.mxu0 %v252
  %300 = vmatpush1.msra.mxu0 %v251
  %301 = vmatprep.subr.mxu0 %v254
  %302 = vmatpush1.msra.mxu0 %v253
  %303 = vmatprep.subr.mxu0 %v256
  %304 = vmatpush1.msra.mxu0 %v255
  %305 = vmatprep.subr.mxu0 %v258
  %306 = vmatpush1.msra.mxu0 %v257
  %307 = vmatprep.subr.mxu0 %v260
  %308 = vmatpush1.msra.mxu0 %v259
  %309 = vmatprep.subr.mxu0 %v262
  %310 = vmatpush1.msra.mxu0 %v261
  %311 = vmatprep.subr.mxu0 %v264
  %312 = vmatpush1.msra.mxu0 %v263
  %313 = vmatprep.subr.mxu0 %v266
  %314 = vmatpush1.msra.mxu0 %v265
  %315 = vmatprep.subr.mxu0 %v268
  %316 = vmatpush1.msra.mxu0 %v267
  %317 = vmatprep.subr.mxu0 %v270
  %318 = vmatpush1.msra.mxu0 %v269
  %319 = vmatprep.subr.mxu0 %v272
  %320 = vmatpush1.msra.mxu0 %v271
  %321 = vmatprep.subr.mxu0 %v274
  %322 = vmatpush1.msra.mxu0 %v273
  %323 = vmatprep.subr.mxu0 %v276
  %324 = vmatpush1.msra.mxu0 %v275
  %325 = vmatprep.subr.mxu0 0.0
  %326 = vmatpush1.msra.mxu0 0.0
  %327 = vmatprep.subr.mxu0 0.0
  %328 = vmatpush1.msra.mxu0 0.0
  %329 = vmatprep.subr.mxu0 0.0
  %330 = vmatpush1.msra.mxu0 0.0
  %331 = vmatprep.subr.mxu0 0.0
  %332 = vmatpush1.msra.mxu0 0.0
  %333 = vmatprep.subr.mxu0 0.0
  %334 = vmatpush1.msra.mxu0 0.0
  %335 = vmatprep.subr.mxu0 0.0
  %336 = vmatpush1.msra.mxu0 0.0
  %337 = vmatprep.subr.mxu0 0.0
  %338 = vmatpush1.msra.mxu0 0.0
  %339 = vmatprep.subr.mxu0 0.0
  %340 = vmatpush1.msra.mxu0 0.0
  %341 = vmatprep.subr.mxu0 0.0
  %342 = vmatpush1.msra.mxu0 0.0
  %343 = vmatprep.subr.mxu0 0.0
  %344 = vmatpush1.msra.mxu0 0.0
  %345 = vmatprep.subr.mxu0 0.0
  %346 = vmatpush1.msra.mxu0 0.0
  %347 = vmatprep.subr.mxu0 0.0
  %348 = vmatpush1.msra.mxu0 0.0
  %349 = vmatprep.subr.mxu0 0.0
  %350 = vmatpush1.msra.mxu0 0.0
  %351 = vmatprep.subr.mxu0 0.0
  %352 = vmatpush1.msra.mxu0 0.0
  %353 = vmatprep.subr.mxu0 0.0
  %354 = vmatpush1.msra.mxu0 0.0
  %355 = vmatprep.subr.mxu0 0.0
  %356 = vmatpush1.msra.mxu0 0.0
  %357 = vmatprep.mubr.f32.mxu0 0.0
  %358 = vmatmul.mubr.f32.gmra.mrb[0].mxu0 %v277
  %v359 = vpop.f32.mrb[0].mxu0
  %v360 = vadd.f32 0.0, %v359
  %v361 = vpop.f32.mrb[0].mxu0
  %v362 = vadd.f32 0.0, %v361
  %363 = vmatprep.mubr.f32.mxu0 0.0
  %364 = vmatmul.mubr.f32.gmra.mrb[0].mxu0 %v278
  %v365 = vpop.f32.mrb[0].mxu0
  %v366 = vadd.f32 0.0, %v365
  %v367 = vpop.f32.mrb[0].mxu0
  %v368 = vadd.f32 0.0, %v367
  %369 = vmatprep.mubr.f32.mxu0 0.0
  %370 = vmatmul.mubr.f32.gmra.mrb[0].mxu0 %v279
  %v371 = vpop.f32.mrb[0].mxu0
  %v372 = vadd.f32 0.0, %v371
  %v373 = vpop.f32.mrb[0].mxu0
  %v374 = vadd.f32 0.0, %v373
  %375 = vmatprep.mubr.f32.mxu0 0.0
  %376 = vmatmul.mubr.f32.gmra.mrb[0].mxu0 %v280
  %v377 = vpop.f32.mrb[0].mxu0
  %v378 = vadd.f32 0.0, %v377
  %v379 = vpop.f32.mrb[0].mxu0
  %v380 = vadd.f32 0.0, %v379
  %381 = vmatprep.mubr.f32.mxu0 0.0
  %382 = vmatmul.mubr.f32.gmra.mrb[0].mxu0 %v281
  %v383 = vpop.f32.mrb[0].mxu0
  %v384 = vadd.f32 0.0, %v383
  %v385 = vpop.f32.mrb[0].mxu0
  %v386 = vadd.f32 0.0, %v385
  %387 = vmatprep.mubr.f32.mxu0 0.0
  %388 = vmatmul.mubr.f32.gmra.mrb[0].mxu0 %v282
  %v389 = vpop.f32.mrb[0].mxu0
  %v390 = vadd.f32 0.0, %v389
  %v391 = vpop.f32.mrb[0].mxu0
  %v392 = vadd.f32 0.0, %v391
  %393 = vmatprep.mubr.f32.mxu0 0.0
  %394 = vmatmul.mubr.f32.gmra.mrb[0].mxu0 %v283
  %v395 = vpop.f32.mrb[0].mxu0
  %v396 = vadd.f32 0.0, %v395
  %v397 = vpop.f32.mrb[0].mxu0
  %v398 = vadd.f32 0.0, %v397
  %399 = vmatprep.mubr.f32.mxu0 0.0
  %400 = vmatmul.mubr.f32.gmra.mrb[0].mxu0 %v284
  %v401 = vpop.f32.mrb[0].mxu0
  %v402 = vadd.f32 0.0, %v401
  %v403 = vpop.f32.mrb[0].mxu0
  %v404 = vadd.f32 0.0, %v403
  %405 = vmatprep.mubr.f32.mxu0 0.0
  %406 = vmatmul.mubr.f32.gmra.mrb[0].mxu0 %v285
  %v407 = vpop.f32.mrb[0].mxu0
  %v408 = vadd.f32 0.0, %v407
  %v409 = vpop.f32.mrb[0].mxu0
  %v410 = vadd.f32 0.0, %v409
  %411 = vmatprep.mubr.f32.mxu0 0.0
  %412 = vmatmul.mubr.f32.gmra.mrb[0].mxu0 %v286
  %v413 = vpop.f32.mrb[0].mxu0
  %v414 = vadd.f32 0.0, %v413
  %v415 = vpop.f32.mrb[0].mxu0
  %v416 = vadd.f32 0.0, %v415
  %417 = vmatprep.mubr.f32.mxu0 0.0
  %418 = vmatmul.mubr.f32.gmra.mrb[0].mxu0 %v287
  %v419 = vpop.f32.mrb[0].mxu0
  %v420 = vadd.f32 0.0, %v419
  %v421 = vpop.f32.mrb[0].mxu0
  %v422 = vadd.f32 0.0, %v421
  %423 = vmatprep.mubr.f32.mxu0 0.0
  %424 = vmatmul.mubr.f32.gmra.mrb[0].mxu0 %v288
  %v425 = vpop.f32.mrb[0].mxu0
  %v426 = vadd.f32 0.0, %v425
  %v427 = vpop.f32.mrb[0].mxu0
  %v428 = vadd.f32 0.0, %v427
  %429 = vmatprep.mubr.f32.mxu0 0.0
  %430 = vmatmul.mubr.f32.gmra.mrb[0].mxu0 %v289
  %v431 = vpop.f32.mrb[0].mxu0
  %v432 = vadd.f32 0.0, %v431
  %v433 = vpop.f32.mrb[0].mxu0
  %v434 = vadd.f32 0.0, %v433
  %435 = vmatprep.mubr.f32.mxu0 0.0
  %436 = vmatmul.mubr.f32.gmra.mrb[0].mxu0 %v290
  %v437 = vpop.f32.mrb[0].mxu0
  %v438 = vadd.f32 0.0, %v437
  %v439 = vpop.f32.mrb[0].mxu0
  %v440 = vadd.f32 0.0, %v439
  %441 = vmatprep.mubr.f32.mxu0 0.0
  %442 = vmatmul.mubr.f32.gmra.mrb[0].mxu0 %v291
  %v443 = vpop.f32.mrb[0].mxu0
  %v444 = vadd.f32 0.0, %v443
  %v445 = vpop.f32.mrb[0].mxu0
  %v446 = vadd.f32 0.0, %v445
  %447 = vmatprep.mubr.f32.mxu0 0.0
  %448 = vmatmul.mubr.f32.gmra.mrb[0].mxu0 %v292
  %v449 = vpop.f32.mrb[0].mxu0
  %v450 = vadd.f32 0.0, %v449
  %v451 = vpop.f32.mrb[0].mxu0
  %v452 = vadd.f32 0.0, %v451
  %453 = vdwg.mxu0
  %v454 = vmax.f32 %v360, 0.0
  %v455 = vmax.f32 %v362, 0.0
  %v456 = vmax.f32 %v366, 0.0
  %v457 = vmax.f32 %v368, 0.0
  %v458 = vmax.f32 %v372, 0.0
  %v459 = vmax.f32 %v374, 0.0
  %v460 = vmax.f32 %v378, 0.0
  %v461 = vmax.f32 %v380, 0.0
  %v462 = vmax.f32 %v384, 0.0
  %v463 = vmax.f32 %v386, 0.0
  %v464 = vmax.f32 %v390, 0.0
  %v465 = vmax.f32 %v392, 0.0
  %v466 = vmax.f32 %v396, 0.0
  %v467 = vmax.f32 %v398, 0.0
  %v468 = vmax.f32 %v402, 0.0
  %v469 = vmax.f32 %v404, 0.0
  %v470 = vmax.f32 %v408, 0.0
  %v471 = vmax.f32 %v410, 0.0
  %v472 = vmax.f32 %v414, 0.0
  %v473 = vmax.f32 %v416, 0.0
  %v474 = vmax.f32 %v420, 0.0
  %v475 = vmax.f32 %v422, 0.0
  %v476 = vmax.f32 %v426, 0.0
  %v477 = vmax.f32 %v428, 0.0
  %v478 = vmax.f32 %v432, 0.0
  %v479 = vmax.f32 %v434, 0.0
  %v480 = vmax.f32 %v438, 0.0
  %v481 = vmax.f32 %v440, 0.0
  %v482 = vmax.f32 %v444, 0.0
  %v483 = vmax.f32 %v446, 0.0
  %v484 = vmax.f32 %v450, 0.0
  %v485 = vmax.f32 %v452, 0.0
  %v486 = vld [vmem:[%s3] sm:$0xff]
  %487 = vmatprep.subr.mxu0 %v455
  %488 = vmatpush1.msra.mxu0 %v454
  %489 = vmatprep.subr.mxu0 %v457
  %490 = vmatpush1.msra.mxu0 %v456
  %491 = vmatprep.subr.mxu0 %v459
  %492 = vmatpush1.msra.mxu0 %v458
  %493 = vmatprep.subr.mxu0 %v461
  %494 = vmatpush1.msra.mxu0 %v460
  %495 = vmatprep.subr.mxu0 %v463
  %496 = vmatpush1.msra.mxu0 %v462
  %497 = vmatprep.subr.mxu0 %v465
  %498 = vmatpush1.msra.mxu0 %v464
  %499 = vmatprep.subr.mxu0 %v467
  %500 = vmatpush1.msra.mxu0 %v466
  %501 = vmatprep.subr.mxu0 %v469
  %502 = vmatpush1.msra.mxu0 %v468
  %503 = vmatprep.subr.mxu0 %v471
  %504 = vmatpush1.msra.mxu0 %v470
  %505 = vmatprep.subr.mxu0 %v473
  %506 = vmatpush1.msra.mxu0 %v472
  %507 = vmatprep.subr.mxu0 %v475
  %508 = vmatpush1.msra.mxu0 %v474
  %509 = vmatprep.subr.mxu0 %v477
  %510 = vmatpush1.msra.mxu0 %v476
  %511 = vmatprep.subr.mxu0 %v479
  %512 = vmatpush1.msra.mxu0 %v478
  %513 = vmatprep.subr.mxu0 %v481
  %514 = vmatpush1.msra.mxu0 %v480
  %515 = vmatprep.subr.mxu0 %v483
  %516 = vmatpush1.msra.mxu0 %v482
  %517 = vmatprep.subr.mxu0 %v485
  %518 = vmatpush1.msra.mxu0 %v484
  %519 = vmatprep.subr.mxu0 0.0
  %520 = vmatpush1.msra.mxu0 0.0
  %521 = vmatprep.subr.mxu0 0.0
  %522 = vmatpush1.msra.mxu0 0.0
  %523 = vmatprep.subr.mxu0 0.0
  %524 = vmatpush1.msra.mxu0 0.0
  %525 = vmatprep.subr.mxu0 0.0
  %526 = vmatpush1.msra.mxu0 0.0
  %527 = vmatprep.subr.mxu0 0.0
  %528 = vmatpush1.msra.mxu0 0.0
  %529 = vmatprep.subr.mxu0 0.0
  %530 = vmatpush1.msra.mxu0 0.0
  %531 = vmatprep.subr.mxu0 0.0
  %532 = vmatpush1.msra.mxu0 0.0
  %533 = vmatprep.subr.mxu0 0.0
  %534 = vmatpush1.msra.mxu0 0.0
  %535 = vmatprep.subr.mxu0 0.0
  %536 = vmatpush1.msra.mxu0 0.0
  %537 = vmatprep.subr.mxu0 0.0
  %538 = vmatpush1.msra.mxu0 0.0
  %539 = vmatprep.subr.mxu0 0.0
  %540 = vmatpush1.msra.mxu0 0.0
  %541 = vmatprep.subr.mxu0 0.0
  %542 = vmatpush1.msra.mxu0 0.0
  %543 = vmatprep.subr.mxu0 0.0
  %544 = vmatpush1.msra.mxu0 0.0
  %545 = vmatprep.subr.mxu0 0.0
  %546 = vmatpush1.msra.mxu0 0.0
  %547 = vmatprep.subr.mxu0 0.0
  %548 = vmatpush1.msra.mxu0 0.0
  %549 = vmatprep.subr.mxu0 0.0
  %550 = vmatpush1.msra.mxu0 0.0
  %551 = vmatprep.mubr.f32.mxu0 0.0
  %552 = vmatmul.mubr.f32.gmra.mrb[0].mxu0 %v486
  %v553 = vpop.f32.mrb[0].mxu0
  %v554 = vadd.f32 0.0, %v553
  %v555 = vpop.f32.mrb[0].mxu0
  %v556 = vadd.f32 0.0, %v555
  %557 = vdwg.mxu0
  %v560 = vcombine.low %v554, %v556
  %v562 = vunpack.c.l.s4 1966171168
  %v563 = vunpack.c.0.s8 %v562
  %v564 = vlaneseq
  %v565 = vshrl.u32 %v564, 7
  %v566 = vsub.s32 %v563, %v565
  %v567 = vrot.slane %v560, %v566
  %v569 = vunpack.c.l.s4 1966171168
  %v570 = vunpack.c.0.s8 %v569
  %v571 = vlaneseq
  %v572 = vshrl.u32 %v571, 7
  %v573 = vsub.s32 %v570, %v572
  %v574 = vrot.slane %v567, %v573
  %v576 = vlaneseq
  %vm577 = vcmp.ge.s32.totalorder %v576, 0
  %vm578 = vcmp.lt.s32.totalorder %v576, 256
  %vm579 = vmand %vm577, %vm578
  %580 = vst.msk [vmem:[%s4] sm:$0x3] %vm579, %v574
  // Predicated region
  $region18: #{nnet_forward.1} parent=0 // pred_check
    _
  $region19: #{nnet_forward.1} parent=0 // pred_check_branch
    %582 = sbr.rel (0) target = $region21
  $region20: #{nnet_forward.1} parent=0 // pred_region
    _
  $region21: #{nnet_forward.1} parent=0 // pred_fallthru
    _
  // Predicated region
  $region22: #{nnet_forward.1} parent=0 // pred_check
    _
  $region23: #{nnet_forward.1} parent=0 // pred_check_branch
    %584 = sbr.rel (0) target = $region25
  $region24: #{nnet_forward.1} parent=0 // pred_region
    _
  $region25: #{nnet_forward.1} parent=0 // pred_fallthru
    _

</llo_original>
